<compile_context>
chip_gen: v7x
topology: tpu7x:2x2x1
jax: 0.10.0
libtpu: 0.0.40
codegen_flags: <defaults>
</compile_context>

<pallas_src>
import jax
import jax.numpy as jnp
from jax import lax
from jax.experimental import pallas as pl
from jax.experimental.pallas import tpu as pltpu

# Fixed smoothing filter from the module's __init__ (used by the reference checker).
SMOOTH_F = jnp.array(
    [[0.0751, 0.1238, 0.0751],
     [0.1238, 0.2042, 0.1238],
     [0.0751, 0.1238, 0.0751]], dtype=jnp.float32)

_CORNER, _EDGE, _CENTER = 0.0751, 0.1238, 0.2042


def _smooth_kernel(x_ref, o_ref):
    """Smooth TB independent (H, W) planes: ReflectionPad2d(1) + fixed 3x3 taps."""
    TB, H, W = o_ref.shape
    x = x_ref[...].astype(jnp.float32)                                  # (TB, H, W)

    # ---- Horizontal pass: sum of left+right neighbours via lane rotations (XLU).
    # For interior lanes roll(1)[j] + roll(W-1)[j] == x[j-1] + x[j+1]; the sum is
    # independent of the rotation direction convention, and both boundary lanes are
    # overwritten below, so this is robust by construction.
    lr = pltpu.roll(x, 1, axis=2) + pltpu.roll(x, W - 1, axis=2)
    # ReflectionPad2d(1): both horizontal neighbours of col 0 are col 1, and both
    # neighbours of col W-1 are col W-2.  Patch just those two lanes (broadcast of a
    # (TB, H, 1) slice across lanes).
    col = lax.broadcasted_iota(jnp.int32, (TB, H, W), 2)
    lr = jnp.where(col == 0, 2.0 * x[:, :, 1:2], lr)
    lr = jnp.where(col == W - 1, 2.0 * x[:, :, W - 2:W - 1], lr)

    # Horizontally-smoothed fields using the exact taps (no separable approximation):
    #   h_off: contribution pattern of a row at vertical offset +-1
    #   h_ctr: contribution pattern of the centre row
    h_off = _CORNER * lr + _EDGE * x
    h_ctr = _EDGE * lr + _CENTER * x

    # ---- Vertical pass: single-row-shifted reads with the reflection folded in
    # (row -1 -> row 1, row H -> row H-2).  Cheap sublane shifts; results keep the
    # block's (TB, H, W) shape, so no sublane-padding blowup.
    up = jnp.concatenate([h_off[:, 1:2, :], h_off[:, :H - 1, :]], axis=1)
    dn = jnp.concatenate([h_off[:, 1:, :], h_off[:, H - 2:H - 1, :]], axis=1)

    o_ref[...] = (up + h_ctr + dn).astype(o_ref.dtype)


def _plan(B, H, W, itemsize):
    """Pick planes-per-step, grid size and an explicit VMEM limit per chip generation."""
    try:
        info = pltpu.get_tpu_info()
        vmem_cap = int(getattr(info, "vmem_capacity_bytes", 0)) or (64 << 20)
    except Exception:
        vmem_cap = 64 << 20  # conservative (v7x-like) fallback

    small_vmem = vmem_cap <= (64 << 20)
    # Raw input block per grid step: big enough to sit near the HBM roofline
    # (per-step overhead ~0.35us), small enough to double-buffer comfortably.
    raw_budget = (2 << 20) if small_vmem else (4 << 20)
    # v7x megacore shards the parallel grid axis over 2 TensorCores -> aim for >=8
    # steps so each core can pipeline; single-TC parts just need a few steps.
    min_steps = 8 if small_vmem else 4

    plane_bytes = H * W * itemsize
    tb = max(1, min(raw_budget // plane_bytes, max(1, B // min_steps), B))
    grid = pl.cdiv(B, tb)

    # Working set: double-buffered in + out blocks plus ~8 block-sized f32
    # temporaries inside the body (generous; measured liveness is ~4) + headroom.
    block = tb * H * W
    need = 4 * block * itemsize + 8 * block * 4 + (1 << 20)
    vmem_limit = int(min(max(need, 32 << 20), int(vmem_cap * 0.9)))
    return tb, grid, vmem_limit


def _smooth_planes(planes):
    """planes: (B, H, W) -> smoothed (B, H, W)."""
    B, H, W = planes.shape
    tb, grid, vmem_limit = _plan(B, H, W, planes.dtype.itemsize)
    # TODO(synk): planes whose whole (H, W) block exceeds the budget still run as one
    # giant block; add H-halo row tiling (pl.Element row offsets or 8-row neighbour
    # blocks) before targeting >~2k x 2k planes on 64 MiB-VMEM parts.
    return pl.pallas_call(
        _smooth_kernel,
        out_shape=jax.ShapeDtypeStruct((B, H, W), planes.dtype),
        grid=(grid,),
        in_specs=[pl.BlockSpec((tb, H, W), lambda b: (b, 0, 0))],
        out_specs=pl.BlockSpec((tb, H, W), lambda b: (b, 0, 0)),
        compiler_params=pltpu.CompilerParams(
            dimension_semantics=("parallel",),
            vmem_limit_bytes=vmem_limit),
    )(planes)


def image_smooth_layer(x):
    """Forward pass of ImageSmoothLayer for 2D (H,W), 3D (N,H,W) or 4D (N,C,H,W) input.

    The PyTorch module's conv weight for chan>1 is diagonal across channels, so the op
    is an identical per-plane smoothing; output shape == input shape.
    """
    shape = x.shape
    H, W = shape[-2], shape[-1]
    if H < 2 or W < 2:
        raise ValueError("ReflectionPad2d(1) requires H, W >= 2")
    if x.ndim == 2:
        planes = x[None, :, :]
    elif x.ndim == 3:
        planes = x
    elif x.ndim == 4:
        N, C, _, _ = shape
        planes = x.reshape(N * C, H, W)
    else:
        raise ValueError(f"unsupported ndim {x.ndim}")
    out = _smooth_planes(planes)
    return out.reshape(shape)


def _reference(x):
    """Pure-JAX reference (reflection pad + 3x3 depthwise conv) for checking."""
    shape = x.shape
    planes = x.reshape((-1,) + shape[-2:])
    H, W = shape[-2:]
    xpad = jnp.pad(planes, ((0, 0), (1, 1), (1, 1)), mode="reflect")
    acc = jnp.zeros_like(planes)
    for di in range(3):
        for dj in range(3):
            acc = acc + SMOOTH_F[di, dj] * xpad[:, di:di + H, dj:dj + W]
    return acc.reshape(shape)


if __name__ == "__main__":
    key = jax.random.PRNGKey(0)
    x = jax.random.normal(key, (2, 4, 16, 16), dtype=jnp.float32)  # NCHW

    out = image_smooth_layer(x)
    out = jax.block_until_ready(out)

    ref = _reference(x)
    assert out.shape == x.shape
    assert out.dtype == x.dtype
    assert jnp.allclose(out, ref, atol=1e-5, rtol=1e-5)

    print("KERNEL_OK")
</pallas_src>

<mosaic_0001>
module attributes {stable_mosaic.version = 11 : i64} {
  func.func @_smooth_kernel(%arg0: i32, %arg1: memref<1x16x16xf32, #tpu.memory_space<vmem>>, %arg2: memref<1x16x16xf32, #tpu.memory_space<vmem>>) attributes {dimension_semantics = [#tpu.dimension_semantics<parallel>], iteration_bounds = array<i64: 8>, scalar_prefetch = 0 : i64, scratch_operands = 0 : i64, tpu.core_type = #tpu.core_type<tc>, window_params = [{transform_indices = @transform_0, window_bounds = array<i64: 1, 16, 16>}, {transform_indices = @transform_1, window_bounds = array<i64: 1, 16, 16>}]} {
    %c0 = arith.constant 0 : index
    %c0_0 = arith.constant 0 : index
    %c0_1 = arith.constant 0 : index
    %0 = vector.load %arg1[%c0, %c0_0, %c0_1] : memref<1x16x16xf32, #tpu.memory_space<vmem>>, vector<1x16x16xf32>
    %c1_i32 = arith.constant 1 : i32
    %1 = tpu.dynamic_rotate %0 by %c1_i32 dim 2 : vector<1x16x16xf32>, i32 -> vector<1x16x16xf32>
    %c15_i32 = arith.constant 15 : i32
    %2 = tpu.dynamic_rotate %0 by %c15_i32 dim 2 : vector<1x16x16xf32>, i32 -> vector<1x16x16xf32>
    %3 = arith.addf %1, %2 : vector<1x16x16xf32>
    %4 = tpu.iota {dimensions = array<i32: 2>} : vector<1x16x16xi32>
    %c0_i32 = arith.constant 0 : i32
    %5 = vector.broadcast %c0_i32 : i32 to vector<1x16x16xi32>
    %6 = arith.cmpi eq, %4, %5 : vector<1x16x16xi32>
    %7 = vector.extract_strided_slice %0 {offsets = [0, 0, 1], sizes = [1, 16, 1], strides = [1, 1, 1]} : vector<1x16x16xf32> to vector<1x16x1xf32>
    %cst = arith.constant 2.000000e+00 : f32
    %8 = vector.broadcast %cst : f32 to vector<1x16x1xf32>
    %9 = arith.mulf %8, %7 : vector<1x16x1xf32>
    %10 = vector.shape_cast %9 : vector<1x16x1xf32> to vector<1x16x1xf32>
    %11 = vector.broadcast %10 : vector<1x16x1xf32> to vector<1x16x16xf32>
    %12 = arith.select %6, %11, %3 : vector<1x16x16xi1>, vector<1x16x16xf32>
    %c15_i32_2 = arith.constant 15 : i32
    %13 = vector.broadcast %c15_i32_2 : i32 to vector<1x16x16xi32>
    %14 = arith.cmpi eq, %4, %13 : vector<1x16x16xi32>
    %15 = vector.extract_strided_slice %0 {offsets = [0, 0, 14], sizes = [1, 16, 1], strides = [1, 1, 1]} : vector<1x16x16xf32> to vector<1x16x1xf32>
    %cst_3 = arith.constant 2.000000e+00 : f32
    %16 = vector.broadcast %cst_3 : f32 to vector<1x16x1xf32>
    %17 = arith.mulf %16, %15 : vector<1x16x1xf32>
    %18 = vector.shape_cast %17 : vector<1x16x1xf32> to vector<1x16x1xf32>
    %19 = vector.broadcast %18 : vector<1x16x1xf32> to vector<1x16x16xf32>
    %20 = arith.select %14, %19, %12 : vector<1x16x16xi1>, vector<1x16x16xf32>
    %cst_4 = arith.constant 7.510000e-02 : f32
    %21 = vector.broadcast %cst_4 : f32 to vector<1x16x16xf32>
    %22 = arith.mulf %21, %20 : vector<1x16x16xf32>
    %cst_5 = arith.constant 1.238000e-01 : f32
    %23 = vector.broadcast %cst_5 : f32 to vector<1x16x16xf32>
    %24 = arith.mulf %23, %0 : vector<1x16x16xf32>
    %25 = arith.addf %22, %24 : vector<1x16x16xf32>
    %cst_6 = arith.constant 1.238000e-01 : f32
    %26 = vector.broadcast %cst_6 : f32 to vector<1x16x16xf32>
    %27 = arith.mulf %26, %20 : vector<1x16x16xf32>
    %cst_7 = arith.constant 2.042000e-01 : f32
    %28 = vector.broadcast %cst_7 : f32 to vector<1x16x16xf32>
    %29 = arith.mulf %28, %0 : vector<1x16x16xf32>
    %30 = arith.addf %27, %29 : vector<1x16x16xf32>
    %31 = vector.extract_strided_slice %25 {offsets = [0, 1, 0], sizes = [1, 1, 16], strides = [1, 1, 1]} : vector<1x16x16xf32> to vector<1x1x16xf32>
    %32 = vector.extract_strided_slice %25 {offsets = [0, 0, 0], sizes = [1, 15, 16], strides = [1, 1, 1]} : vector<1x16x16xf32> to vector<1x15x16xf32>
    %33 = tpu.concatenate %31, %32 in 1 : vector<1x1x16xf32>, vector<1x15x16xf32> -> vector<1x16x16xf32>
    %34 = vector.extract_strided_slice %25 {offsets = [0, 1, 0], sizes = [1, 15, 16], strides = [1, 1, 1]} : vector<1x16x16xf32> to vector<1x15x16xf32>
    %35 = vector.extract_strided_slice %25 {offsets = [0, 14, 0], sizes = [1, 1, 16], strides = [1, 1, 1]} : vector<1x16x16xf32> to vector<1x1x16xf32>
    %36 = tpu.concatenate %34, %35 in 1 : vector<1x15x16xf32>, vector<1x1x16xf32> -> vector<1x16x16xf32>
    %37 = arith.addf %33, %30 : vector<1x16x16xf32>
    %38 = arith.addf %37, %36 : vector<1x16x16xf32>
    %c0_8 = arith.constant 0 : index
    %c0_9 = arith.constant 0 : index
    %c0_10 = arith.constant 0 : index
    %39 = vector.load %arg2[%c0_8, %c0_9, %c0_10] : memref<1x16x16xf32, #tpu.memory_space<vmem>>, vector<1x16x16xf32>
    tpu.vector_store %arg2[%c0_8, %c0_9, %c0_10], %38 {strides = array<i32>} : memref<1x16x16xf32, #tpu.memory_space<vmem>>, vector<1x16x16xf32>,
    return
  }
  func.func @transform_0(%arg0: i32) -> (i32, i32, i32) {
    %c0_i32 = arith.constant 0 : i32
    %c0_i32_0 = arith.constant 0 : i32
    %c0_i32_1 = arith.constant 0 : i32
    return %arg0, %c0_i32, %c0_i32_0 : i32, i32, i32
  }
  func.func @transform_1(%arg0: i32) -> (i32, i32, i32) {
    %c0_i32 = arith.constant 0 : i32
    %c0_i32_0 = arith.constant 0 : i32
    %c0_i32_1 = arith.constant 0 : i32
    return %arg0, %c0_i32, %c0_i32_0 : i32, i32, i32
  }
}

</mosaic_0001>

<llo_original>
// kernel: tpu_custom_call.1
$region0: #{tpu_custom_call.1}
  #allocation0 [shape = 'u32[]', space=smem, size = 0x4, offset = 0x4, fixed_abs, tag = 'smem constant byte address 0x4 - core index']
  #allocation1 [shape = 'u32[144,128]{1,0:T(1,128)}', space=vmem, size = 0x12000, scoped, tag = 'internal scratch']
  %s0 = inlined_call_operand.hbm [shape: f32[8,16,16], index: 0, kind: input, shape index: {}]
  %s1 = inlined_call_operand.hbm [shape: f32[8,16,16], index: 1, kind: output, shape index: {}]
  %s2 = sld [smem:[#allocation0]]
  $region41: #{tpu_custom_call.1} parent=0
    _
  %s4 = ssub.s32 1, %s2
  %s5 = scalar_select 0, %s4, %s2
  $region1: #{tpu_custom_call.1} parent=0
    #allocation2 [shape = 'u8[16384]{0}', space=vmem, size = 0x4000, scoped, tag = 'input window, operand 0']
    #allocation3 [shape = 's32[2]{0}', space=sflag, size = 0x8, scoped, tag = 'scoped memory for tpu_custom_call.1']
    #allocation4 [shape = 's32[2]{0}', space=sflag, size = 0x8, scoped, tag = 'scoped memory for tpu_custom_call.1']
    #allocation5 [shape = 'u8[16384]{0}', space=vmem, size = 0x4000, scoped, tag = 'output window, operand 0']
    %6 = vsyncpa [#allocation3], 0
    %s7 = scalar_lea.sflag [#allocation3], 1
    %8 = vsyncpa %s7, 0
    %9 = vsyncpa [#allocation4], 0
    %s10 = scalar_lea.sflag [#allocation4], 1
    %11 = vsyncpa %s10, 0
    loop: start=0, step=1, limit=10
    $region2: #{tpu_custom_call.1} parent=1 // loop_pre_header
      _
    $region3: #{tpu_custom_call.1} parent=1 // loop_header
      %s13 = sphi 0, %s17
      %p14 = scmp.ge.s32.totalorder %s13, 10
      %s23 = sphi 0, %s25
      %s26 = sphi 0, %s23
      %s27 = sphi 0, %s26
      %s43 = sphi 0, %s27
      %s49 = sphi 0, %s51
      %s52 = sphi 0, %s49
      %s53 = sphi 0, %s52
      %s69 = sphi 0, %s53
    $region4: #{tpu_custom_call.1} parent=1 // loop_header_branch
      %16 = sbr.rel (%p14) target = $region8
    $region5: #{tpu_custom_call.1} parent=1 // loop_body
      %s18 = ssub.s32 %s13, 1
      %s19 = ssub.s32 %s13, 2
      %s20 = sadd.s32 %s13, 1
      %s21 = ssub.s32 %s13, %s20
      %p22 = scmp.eq.s32.totalorder %s21, 0
      %s24 = sadd.s32 %s23, 1
      %s25 = scalar_select %p22, %s23, %s24
      %p28 = pneg %p22
      %p29 = scmp.eq.s32.totalorder %s13, 7
      %p30 = por %p28, %p29
      %p31 = scmp.ne.s32.totalorder %s23, %s26
      %p32 = scmp.eq.s32.totalorder %s13, 0
      %p33 = por %p31, %p32
      %p34 = scmp.ne.s32.totalorder %s23, %s26
      %p35 = scmp.eq.s32.totalorder %s18, 7
      %p36 = por %p34, %p35
      %p37 = scmp.ne.s32.totalorder %s26, %s27
      %p38 = scmp.eq.s32.totalorder %s18, 0
      %p39 = por %p37, %p38
      %p40 = scmp.ne.s32.totalorder %s26, %s27
      %p41 = scmp.eq.s32.totalorder %s19, 7
      %p42 = por %p40, %p41
      %p44 = scmp.ne.s32.totalorder %s27, %s43
      %p45 = scmp.eq.s32.totalorder %s19, 0
      %p46 = por %p44, %p45
      %s47 = ssub.s32 %s13, %s20
      %p48 = scmp.eq.s32.totalorder %s47, 0
      %s50 = sadd.s32 %s49, 1
      %s51 = scalar_select %p48, %s49, %s50
      %p54 = pneg %p48
      %p55 = scmp.eq.s32.totalorder %s13, 7
      %p56 = por %p54, %p55
      %p57 = scmp.ne.s32.totalorder %s49, %s52
      %p58 = scmp.eq.s32.totalorder %s13, 0
      %p59 = por %p57, %p58
      %p60 = scmp.ne.s32.totalorder %s49, %s52
      %p61 = scmp.eq.s32.totalorder %s18, 7
      %p62 = por %p60, %p61
      %p63 = scmp.ne.s32.totalorder %s52, %s53
      %p64 = scmp.eq.s32.totalorder %s18, 0
      %p65 = por %p63, %p64
      %p66 = scmp.ne.s32.totalorder %s52, %s53
      %p67 = scmp.eq.s32.totalorder %s19, 7
      %p68 = por %p66, %p67
      %p70 = scmp.ne.s32.totalorder %s53, %s69
      %p71 = scmp.eq.s32.totalorder %s19, 0
      %p72 = por %p70, %p71
      %p73 = scmp.le.s32.totalorder 1, %s13
      %p74 = scmp.lt.s32.totalorder %s13, 9
      %p75 = pnand %p73, %p74
      %p76 = pneg %p75
      // Predicated region
      $region9: #{tpu_custom_call.1} parent=5 // pred_check
        _
      $region10: #{tpu_custom_call.1} parent=5 // pred_check_branch
        %78 = sbr.rel (%p75) target = $region12
      $region11: #{tpu_custom_call.1} parent=5 // pred_region
        %s79 = ssub.s32 %s13, 1
      $region12: #{tpu_custom_call.1} parent=5 // pred_fallthru
        _
      %p80 = scmp.lt.s32.totalorder %s13, 8
      // Predicated region
      $region13: #{tpu_custom_call.1} parent=5 // pred_check
        %p81 = pneg %p80
      $region14: #{tpu_custom_call.1} parent=5 // pred_check_branch
        %83 = sbr.rel (%p81) target = $region16
      $region15: #{tpu_custom_call.1} parent=5 // pred_region
        // Predicated region
        $region17: #{tpu_custom_call.1} parent=15 // pred_check
          %p84 = pneg %p33
        $region18: #{tpu_custom_call.1} parent=15 // pred_check_branch
          %86 = sbr.rel (%p84) target = $region20
        $region19: #{tpu_custom_call.1} parent=15 // pred_region
          %s87 = sand.u32 %s23, 1
          %s88 = scalar_lea.sflag [#allocation3], %s87
          %s89 = sand.u32 %s23, 1
          %s90 = smul.addr %s89, 16
          %s91 = scalar_lea.vmem [#allocation2], %s90
          %s93 = ssub.s32 256, 256
          %94 = vsyncadd %s88, %s93
          %s95 = smul.addr %s13, 2
          %s96 = smul.addr %s95, 128
          %s97 = scalar_lea.hbm %s0, %s96
          %s98 = sshll.u32 %s91, 4
          %s99 = int_to_ptr.vmem [resolvable:$true] %s98
          %104 = dma.hbm_to_vmem [thread:$0]  %s97, 256, %s99, %s88, 128, 128, 8
        $region20: #{tpu_custom_call.1} parent=15 // pred_fallthru
          _
      $region16: #{tpu_custom_call.1} parent=5 // pred_fallthru
        _
      %p105 = scmp.le.s32.totalorder 1, %s13
      %p106 = scmp.lt.s32.totalorder %s13, 9
      %p107 = pnand %p105, %p106
      %p108 = pneg %p107
      // Predicated region
      $region21: #{tpu_custom_call.1} parent=5 // pred_check
        _
      $region22: #{tpu_custom_call.1} parent=5 // pred_check_branch
        %110 = sbr.rel (%p107) target = $region24
      $region23: #{tpu_custom_call.1} parent=5 // pred_region
        %s111 = ssub.s32 %s13, 1
        %s112 = sand.u32 %s26, 1
        %s113 = scalar_lea.sflag [#allocation3], %s112
        %s114 = sand.u32 %s26, 1
        %s115 = smul.addr %s114, 16
        %s116 = scalar_lea.vmem [#allocation2], %s115
        // Predicated region
        $region25: #{tpu_custom_call.1} parent=23 // pred_check
          %p117 = pneg %p39
        $region26: #{tpu_custom_call.1} parent=23 // pred_check_branch
          %119 = sbr.rel (%p117) target = $region28
        $region27: #{tpu_custom_call.1} parent=23 // pred_region
          %120 = dma.done %s113, 256
        $region28: #{tpu_custom_call.1} parent=23 // pred_fallthru
          _
        %s121 = sand.u32 %s26, 1
        %s122 = scalar_lea.sflag [#allocation3], %s121
        %s123 = sand.u32 %s26, 1
        %s124 = smul.addr %s123, 16
        %s125 = scalar_lea.vmem [#allocation2], %s124
        %p126 = pneg %p39
        %p127 = pneg %p36
        %p128 = pneg %p65
        %p129 = pneg %p62
        %s130 = sand.u32 %s52, 1
        %s131 = scalar_lea.sflag [#allocation4], %s130
        %s132 = sand.u32 %s52, 1
        %s133 = smul.addr %s132, 16
        %s134 = scalar_lea.vmem [#allocation5], %s133
        %v135 = vld [vmem:[%s116] sm:$0xff]
        %v136 = vld [vmem:[%s116 + $0x8] sm:$0xff]
        %vm137 = vcmask 1047680
        %138 = vrot.lane.b32.xlu0 %v135, 16
        %v139 = vpop.permute.xlu0 %138
        %v140 = vsel %vm137, %v139, %v135
        %141 = vrot.lane.b32.xlu0 %v136, 16
        %v142 = vpop.permute.xlu0 %141
        %v143 = vsel %vm137, %v142, %v136
        %144 = vrot.lane.b32.xlu0 %v140, 16
        %v145 = vpop.permute.xlu0 %144
        %146 = vrot.lane.b32.xlu0 %v143, 16
        %v147 = vpop.permute.xlu0 %146
        %v148 = vsel %vm137, %v145, %v135
        %v149 = vsel %vm137, %v147, %v136
        %152 = vrot.lane.b32.xlu0 %v148, 14
        %v153 = vpop.permute.xlu0 %152
        %154 = vrot.lane.b32.xlu0 %v149, 14
        %v155 = vpop.permute.xlu0 %154
        %v158 = vadd.f32 %v148, %v153
        %v159 = vadd.f32 %v149, %v155
        %v160 = vlaneseq
        %v161 = vand.u32 %v160, 127
        %vm162 = vcmp.eq.s32.totalorder %v161, 0
        %v163 = vmul.f32 %v135, 2.0
        %v164 = vmul.f32 %v136, 2.0
        %166 = vset.pattern.permute.xlu0 1
        %167 = vperm.xlu0 %166, %v163
        %v168 = vpop.permute.xlu0 %167
        %171 = vset.pattern.permute.xlu0 1
        %172 = vperm.xlu0 %171, %v164
        %v173 = vpop.permute.xlu0 %172
        %177 = vrot.lane.b32.xlu0 %v158, 113
        %v178 = vpop.permute.xlu0 %177
        %179 = vrot.lane.b32.xlu0 %v159, 113
        %v180 = vpop.permute.xlu0 %179
        %v183 = vsel %vm162, %v168, %v178
        %v184 = vsel %vm162, %v173, %v180
        %vm185 = vcmp.eq.s32.totalorder %v161, 15
        %186 = vset.pattern.permute.xlu0 14
        %187 = vperm.xlu0 %186, %v163
        %v188 = vpop.permute.xlu0 %187
        %190 = vset.pattern.permute.xlu0 14
        %191 = vperm.xlu0 %190, %v164
        %v192 = vpop.permute.xlu0 %191
        %v194 = vsel %vm185, %v188, %v183
        %v195 = vsel %vm185, %v192, %v184
        %v196 = vmul.f32 %v194, 0.0751
        %v197 = vmul.f32 %v195, 0.0751
        %v198 = vmul.f32 %v135, 0.1238
        %v199 = vmul.f32 %v136, 0.1238
        %v200 = vadd.f32 %v196, %v198
        %v201 = vadd.f32 %v197, %v199
        %v202 = vmul.f32 %v194, 0.1238
        %v203 = vmul.f32 %v195, 0.1238
        %v204 = vmul.f32 %v135, 0.2042
        %v205 = vmul.f32 %v136, 0.2042
        %v206 = vadd.f32 %v202, %v204
        %v207 = vadd.f32 %v203, %v205
        %v209 = vrot.slane %v200, 1
        %vm212 = vcmask 1040384
        %v213 = vrot.slane %v200, 7
        %v214 = vrot.slane %v201, 7
        %v215 = vsel %vm212, %v213, %v214
        %v218 = vsel %vm212, %v209, %v213
        %vm219 = vcmask 1046528
        %v220 = vrot.slane %v201, 1
        %v221 = vsel %vm219, %v209, %v220
        %v225 = vsel %vm219, %v220, %v214
        %v226 = vadd.f32 %v218, %v206
        %v227 = vadd.f32 %v215, %v207
        %v228 = vadd.f32 %v226, %v221
        %v229 = vadd.f32 %v227, %v225
        %vm230 = vcmask 130048
        %231 = vst.msk [vmem:[%s134] sm:$0xff] %vm230, %v228
        %232 = vst.msk [vmem:[%s134 + $0x8] sm:$0xff] %vm230, %v229
        %s233 = sand.u32 %s52, 1
        %s234 = scalar_lea.sflag [#allocation4], %s233
        %s235 = sand.u32 %s52, 1
        %s236 = smul.addr %s235, 16
        %s237 = scalar_lea.vmem [#allocation5], %s236
        // Predicated region
        $region29: #{tpu_custom_call.1} parent=23 // pred_check
          %p238 = pneg %p62
        $region30: #{tpu_custom_call.1} parent=23 // pred_check_branch
          %240 = sbr.rel (%p238) target = $region32
        $region31: #{tpu_custom_call.1} parent=23 // pred_region
          %s242 = ssub.s32 256, 256
          %243 = vsyncadd %s234, %s242
          %s244 = smul.addr %s18, 2
          %s245 = smul.addr %s244, 128
          %s246 = scalar_lea.hbm %s1, %s245
          %s247 = sshll.u32 %s237, 4
          %s248 = int_to_ptr.vmem [resolvable:$true] %s247
          %253 = dma.vmem_to_hbm [thread:$0]  %s248, 256, %s246, %s234, 128, 128, 8
        $region32: #{tpu_custom_call.1} parent=23 // pred_fallthru
          _
      $region24: #{tpu_custom_call.1} parent=5 // pred_fallthru
        _
      %p254 = scmp.le.s32.totalorder 2, %s13
      // Predicated region
      $region33: #{tpu_custom_call.1} parent=5 // pred_check
        %p255 = pneg %p254
      $region34: #{tpu_custom_call.1} parent=5 // pred_check_branch
        %257 = sbr.rel (%p255) target = $region36
      $region35: #{tpu_custom_call.1} parent=5 // pred_region
        %s258 = ssub.s32 %s13, 2
        // Predicated region
        $region37: #{tpu_custom_call.1} parent=35 // pred_check
          %p259 = pneg %p68
        $region38: #{tpu_custom_call.1} parent=35 // pred_check_branch
          %261 = sbr.rel (%p259) target = $region40
        $region39: #{tpu_custom_call.1} parent=35 // pred_region
          %s262 = sand.u32 %s53, 1
          %s263 = scalar_lea.sflag [#allocation4], %s262
          %s264 = sand.u32 %s53, 1
          %s265 = smul.addr %s264, 16
          %s266 = scalar_lea.vmem [#allocation5], %s265
          %267 = dma.done %s263, 256
        $region40: #{tpu_custom_call.1} parent=35 // pred_fallthru
          _
      $region36: #{tpu_custom_call.1} parent=5 // pred_fallthru
        _
    $region6: #{tpu_custom_call.1} parent=1 // loop_footer
      %s17 = sadd.s32 1, %s13
    $region7: #{tpu_custom_call.1} parent=1 // loop_footer_branch
      %12 = sbr.rel target = $region3
    $region8: #{tpu_custom_call.1} parent=1 // loop_exit
      _
    %268 = vsyncpa [#allocation3], 1
    %s269 = scalar_lea.sflag [#allocation3], 1
    %270 = vsyncpa %s269, 1
    %271 = vsyncpa [#allocation4], 1
    %s272 = scalar_lea.sflag [#allocation4], 1
    %273 = vsyncpa %s272, 1

</llo_original>
